<compile_context>
chip_gen: v7x
topology: tpu7x:2x2x1
jax: 0.10.0
libtpu: 0.0.40
codegen_flags: <defaults>
</compile_context>

<pallas_src>
import functools

import jax
import jax.numpy as jnp
from jax.experimental import pallas as pl
from jax.experimental.pallas import tpu as pltpu


def _cost_volume_kernel(a_ref, band_ref, out_ref, *, D, Lp):
    """One (batch, ph) grid step: all D pw displacements for this row displacement.

    a_ref:    (1, KKC, Lp)     tap-expanded, zero-padded, flattened feat1
    band_ref: (1, 1, KKC, Lb)  flattened feat2 row-band for this ph (Lb = Lp + 2d)
    out_ref:  (1, 1, D, Lp)    output slab: one lane-dense row per pw
    """
    # Hoisted out of the pw loop: the f1 operand does not depend on pw (or ph).
    a32 = a_ref[0].astype(jnp.float32)                              # (KKC, Lp)
    for pw in range(D):
        # Static lane-shift window of the resident band; cast per slice.
        s32 = band_ref[0, 0, :, pw:pw + Lp].astype(jnp.float32)     # (KKC, Lp)
        acc = jnp.sum(a32 * s32, axis=0)                            # reduce taps*channels
        out_ref[0, 0, pw] = acc.astype(out_ref.dtype)               # lane-dense store


def cost_volume(feat1, feat2, *, kernel_size, max_displacement, stride=1):
    """Equivalent of CostVolume.forward. feat1/feat2: (B, C, H, W) -> (B, D*D, oH, oW)."""
    assert feat1.ndim == 4 and feat2.ndim == 4, "Expect 4 dimensional inputs"
    B, C, H, W = feat1.shape
    K = kernel_size
    P = (K - 1) // 2
    d = max_displacement
    D = 2 * d + 1
    s = stride
    oH = (H + 2 * P - K) // s + 1
    oW = (W + 2 * P - K) // s + 1

    # Geometry of the lane-dense flattened layout (shared row width Wc for f1 and f2).
    Hs = (oH - 1) * s + 1
    Ws = (oW - 1) * s + 1
    Wc = Ws + 2 * d                 # flattened row width
    Hc = Hs + 2 * d                 # rows of the f2 crop
    Lp = Hs * Wc                    # flattened spatial length per (tap, channel)
    Lb = Lp + 2 * d                 # band length so every static pw slice is in-bounds
    KK = K * K
    KKC = KK * C

    # ---- wrapper-side layout prep (plain XLA, once, in HBM) -----------------------
    f1p = jnp.pad(feat1, ((0, 0), (0, 0), (P, P), (P, P)))
    f2p = jnp.pad(feat2, ((0, 0), (0, 0), (P + d, P + d), (P + d, P + d)))

    # f1: expand the K*K kernel taps, keep only stride-aligned positions (zeros
    # elsewhere), pad rows to width Wc, flatten spatial -> lane-dense last axis.
    taps = []
    for i in range(K):
        for j in range(K):
            taps.append(f1p[:, :, i:i + Hs, j:j + Ws])              # (B, C, Hs, Ws)
    A = jnp.stack(taps, axis=1).reshape(B, KKC, Hs, Ws)
    if s > 1:
        ym = (jnp.arange(Hs) % s) == 0
        xm = (jnp.arange(Ws) % s) == 0
        A = A * (ym[:, None] & xm[None, :]).astype(A.dtype)
    A = jnp.pad(A, ((0, 0), (0, 0), (0, 0), (0, Wc - Ws)))
    Aflat = A.reshape(B, KKC, Lp)

    # f2: tap-expanded crop flattened with the same row width Wc, then pre-banded per
    # row displacement ph so the kernel only needs static lane shifts of the band.
    crops = []
    for i in range(K):
        for j in range(K):
            crops.append(f2p[:, :, i:i + Hc, j:j + Wc])             # (B, C, Hc, Wc)
    F2 = jnp.stack(crops, axis=1).reshape(B, KKC, Hc * Wc)
    F2 = jnp.pad(F2, ((0, 0), (0, 0), (0, 2 * d)))                  # slack for band tail
    F2band = jnp.stack(
        [F2[:, :, ph * Wc: ph * Wc + Lb] for ph in range(D)], axis=1
    )                                                               # (B, D, KKC, Lb)

    kernel = functools.partial(_cost_volume_kernel, D=D, Lp=Lp)

    itemsize = jnp.dtype(feat1.dtype).itemsize
    blk_bytes = (KKC * Lp + KKC * Lb + D * Lp) * itemsize
    vmem_limit = int(min(100 * 2 ** 20, max(16 * 2 ** 20, 6 * blk_bytes)))

    raw = pl.pallas_call(
        kernel,
        out_shape=jax.ShapeDtypeStruct((B, D, D, Lp), feat1.dtype),
        grid_spec=pltpu.PrefetchScalarGridSpec(
            num_scalar_prefetch=0,
            grid=(B, D),
            in_specs=[
                pl.BlockSpec((1, KKC, Lp), lambda b, ph: (b, 0, 0)),
                pl.BlockSpec((1, 1, KKC, Lb), lambda b, ph: (b, ph, 0, 0)),
            ],
            out_specs=pl.BlockSpec((1, 1, D, Lp), lambda b, ph: (b, ph, 0, 0)),
        ),
        compiler_params=pltpu.CompilerParams(
            dimension_semantics=("parallel", "parallel"),
            vmem_limit_bytes=vmem_limit,
        ),
        cost_estimate=pl.CostEstimate(
            flops=2 * B * D * D * KKC * Lp,
            transcendentals=0,
            bytes_accessed=(Aflat.size + F2band.size + B * D * D * Lp) * itemsize,
        ),
    )(Aflat, F2band)

    # Strip the lane padding (and stride scattering) to recover (B, D*D, oH, oW).
    out = raw.reshape(B, D * D, Hs, Wc)[:, :, ::s, ::s][:, :, :oH, :oW]
    return out


def cost_volume_reference(feat1, feat2, *, kernel_size, max_displacement, stride=1):
    """Pure-JAX reference implementing the same correlation-sampler math."""
    B, C, H, W = feat1.shape
    K = kernel_size
    P = (K - 1) // 2
    d = max_displacement
    D = 2 * d + 1
    s = stride
    oH = (H + 2 * P - K) // s + 1
    oW = (W + 2 * P - K) // s + 1
    f1p = jnp.pad(feat1, ((0, 0), (0, 0), (P, P), (P, P)))
    f2p = jnp.pad(feat2, ((0, 0), (0, 0), (P + d, P + d), (P + d, P + d)))
    outs = []
    for ph in range(D):
        for pw in range(D):
            acc = jnp.zeros((B, oH, oW), jnp.float32)
            for i in range(K):
                for j in range(K):
                    a = f1p[:, :, i: i + (oH - 1) * s + 1: s, j: j + (oW - 1) * s + 1: s]
                    b = f2p[
                        :,
                        :,
                        ph + i: ph + i + (oH - 1) * s + 1: s,
                        pw + j: pw + j + (oW - 1) * s + 1: s,
                    ]
                    acc = acc + jnp.sum(a.astype(jnp.float32) * b.astype(jnp.float32), axis=1)
            outs.append(acc)
    return jnp.stack(outs, axis=1).astype(feat1.dtype)  # (B, D*D, oH, oW)


if __name__ == "__main__":
    # Module has no learnable parameters; hyper-params chosen PWC-Net style.
    kernel_size = 1
    max_displacement = 4
    stride = 1

    B, C, H, W = 2, 4, 16, 16
    key = jax.random.PRNGKey(0)
    k1, k2 = jax.random.split(key)
    feat1 = jax.random.normal(k1, (B, C, H, W), dtype=jnp.float32)
    feat2 = jax.random.normal(k2, (B, C, H, W), dtype=jnp.float32)

    out = cost_volume(
        feat1, feat2, kernel_size=kernel_size, max_displacement=max_displacement, stride=stride
    )
    out = jax.block_until_ready(out)

    ref = cost_volume_reference(
        feat1, feat2, kernel_size=kernel_size, max_displacement=max_displacement, stride=stride
    )
    ref = jax.block_until_ready(ref)

    D = 2 * max_displacement + 1
    assert out.shape == (B, D * D, H, W), out.shape
    assert jnp.allclose(out, ref, atol=1e-4, rtol=1e-4), "mismatch vs reference"
    print("KERNEL_OK")
</pallas_src>

<mosaic_0001>
module attributes {stable_mosaic.version = 11 : i64} {
  func.func @_cost_volume_kernel(%arg0: i32, %arg1: i32, %arg2: memref<1x4x384xf32, #tpu.memory_space<vmem>>, %arg3: memref<1x1x4x392xf32, #tpu.memory_space<vmem>>, %arg4: memref<1x1x9x384xf32, #tpu.memory_space<vmem>>) attributes {dimension_semantics = [#tpu.dimension_semantics<parallel>, #tpu.dimension_semantics<parallel>], iteration_bounds = array<i64: 2, 9>, scalar_prefetch = 0 : i64, scratch_operands = 0 : i64, tpu.core_type = #tpu.core_type<tc>, window_params = [{transform_indices = @transform_0, window_bounds = array<i64: 1, 4, 384>}, {transform_indices = @transform_1, window_bounds = array<i64: 1, 1, 4, 392>}, {transform_indices = @transform_2, window_bounds = array<i64: 1, 1, 9, 384>}]} {
    %c0 = arith.constant 0 : index
    %c0_0 = arith.constant 0 : index
    %c0_1 = arith.constant 0 : index
    %0 = vector.load %arg2[%c0, %c0_0, %c0_1] : memref<1x4x384xf32, #tpu.memory_space<vmem>>, vector<1x4x384xf32>
    %1 = vector.shape_cast %0 : vector<1x4x384xf32> to vector<4x384xf32>
    %c0_2 = arith.constant 0 : index
    %c0_3 = arith.constant 0 : index
    %c0_4 = arith.constant 0 : index
    %c0_5 = arith.constant 0 : index
    %2 = vector.load %arg3[%c0_2, %c0_3, %c0_4, %c0_5] : memref<1x1x4x392xf32, #tpu.memory_space<vmem>>, vector<1x1x4x384xf32>
    %3 = vector.shape_cast %2 : vector<1x1x4x384xf32> to vector<4x384xf32>
    %4 = arith.mulf %1, %3 : vector<4x384xf32>
    %cst = arith.constant dense<0.000000e+00> : vector<384xf32>
    %5 = vector.multi_reduction <add>, %4, %cst [0] : vector<4x384xf32> to vector<384xf32>
    %c0_6 = arith.constant 0 : index
    %c0_7 = arith.constant 0 : index
    %c0_8 = arith.constant 0 : index
    %c0_9 = arith.constant 0 : index
    %6 = vector.load %arg4[%c0_6, %c0_7, %c0_8, %c0_9] : memref<1x1x9x384xf32, #tpu.memory_space<vmem>>, vector<1x1x1x384xf32>
    %7 = vector.shape_cast %6 : vector<1x1x1x384xf32> to vector<384xf32>
    %8 = vector.shape_cast %5 : vector<384xf32> to vector<1x1x1x384xf32>
    tpu.vector_store %arg4[%c0_6, %c0_7, %c0_8, %c0_9], %8 {strides = array<i32>} : memref<1x1x9x384xf32, #tpu.memory_space<vmem>>, vector<1x1x1x384xf32>,
    %c0_10 = arith.constant 0 : index
    %c0_11 = arith.constant 0 : index
    %c0_12 = arith.constant 0 : index
    %c1 = arith.constant 1 : index
    %9 = vector.load %arg3[%c0_10, %c0_11, %c0_12, %c1] : memref<1x1x4x392xf32, #tpu.memory_space<vmem>>, vector<1x1x4x384xf32>
    %10 = vector.shape_cast %9 : vector<1x1x4x384xf32> to vector<4x384xf32>
    %11 = arith.mulf %1, %10 : vector<4x384xf32>
    %cst_13 = arith.constant dense<0.000000e+00> : vector<384xf32>
    %12 = vector.multi_reduction <add>, %11, %cst_13 [0] : vector<4x384xf32> to vector<384xf32>
    %c0_14 = arith.constant 0 : index
    %c0_15 = arith.constant 0 : index
    %c1_16 = arith.constant 1 : index
    %c0_17 = arith.constant 0 : index
    %13 = vector.load %arg4[%c0_14, %c0_15, %c1_16, %c0_17] : memref<1x1x9x384xf32, #tpu.memory_space<vmem>>, vector<1x1x1x384xf32>
    %14 = vector.shape_cast %13 : vector<1x1x1x384xf32> to vector<384xf32>
    %15 = vector.shape_cast %12 : vector<384xf32> to vector<1x1x1x384xf32>
    tpu.vector_store %arg4[%c0_14, %c0_15, %c1_16, %c0_17], %15 {strides = array<i32>} : memref<1x1x9x384xf32, #tpu.memory_space<vmem>>, vector<1x1x1x384xf32>,
    %c0_18 = arith.constant 0 : index
    %c0_19 = arith.constant 0 : index
    %c0_20 = arith.constant 0 : index
    %c2 = arith.constant 2 : index
    %16 = vector.load %arg3[%c0_18, %c0_19, %c0_20, %c2] : memref<1x1x4x392xf32, #tpu.memory_space<vmem>>, vector<1x1x4x384xf32>
    %17 = vector.shape_cast %16 : vector<1x1x4x384xf32> to vector<4x384xf32>
    %18 = arith.mulf %1, %17 : vector<4x384xf32>
    %cst_21 = arith.constant dense<0.000000e+00> : vector<384xf32>
    %19 = vector.multi_reduction <add>, %18, %cst_21 [0] : vector<4x384xf32> to vector<384xf32>
    %c0_22 = arith.constant 0 : index
    %c0_23 = arith.constant 0 : index
    %c2_24 = arith.constant 2 : index
    %c0_25 = arith.constant 0 : index
    %20 = vector.load %arg4[%c0_22, %c0_23, %c2_24, %c0_25] : memref<1x1x9x384xf32, #tpu.memory_space<vmem>>, vector<1x1x1x384xf32>
    %21 = vector.shape_cast %20 : vector<1x1x1x384xf32> to vector<384xf32>
    %22 = vector.shape_cast %19 : vector<384xf32> to vector<1x1x1x384xf32>
    tpu.vector_store %arg4[%c0_22, %c0_23, %c2_24, %c0_25], %22 {strides = array<i32>} : memref<1x1x9x384xf32, #tpu.memory_space<vmem>>, vector<1x1x1x384xf32>,
    %c0_26 = arith.constant 0 : index
    %c0_27 = arith.constant 0 : index
    %c0_28 = arith.constant 0 : index
    %c3 = arith.constant 3 : index
    %23 = vector.load %arg3[%c0_26, %c0_27, %c0_28, %c3] : memref<1x1x4x392xf32, #tpu.memory_space<vmem>>, vector<1x1x4x384xf32>
    %24 = vector.shape_cast %23 : vector<1x1x4x384xf32> to vector<4x384xf32>
    %25 = arith.mulf %1, %24 : vector<4x384xf32>
    %cst_29 = arith.constant dense<0.000000e+00> : vector<384xf32>
    %26 = vector.multi_reduction <add>, %25, %cst_29 [0] : vector<4x384xf32> to vector<384xf32>
    %c0_30 = arith.constant 0 : index
    %c0_31 = arith.constant 0 : index
    %c3_32 = arith.constant 3 : index
    %c0_33 = arith.constant 0 : index
    %27 = vector.load %arg4[%c0_30, %c0_31, %c3_32, %c0_33] : memref<1x1x9x384xf32, #tpu.memory_space<vmem>>, vector<1x1x1x384xf32>
    %28 = vector.shape_cast %27 : vector<1x1x1x384xf32> to vector<384xf32>
    %29 = vector.shape_cast %26 : vector<384xf32> to vector<1x1x1x384xf32>
    tpu.vector_store %arg4[%c0_30, %c0_31, %c3_32, %c0_33], %29 {strides = array<i32>} : memref<1x1x9x384xf32, #tpu.memory_space<vmem>>, vector<1x1x1x384xf32>,
    %c0_34 = arith.constant 0 : index
    %c0_35 = arith.constant 0 : index
    %c0_36 = arith.constant 0 : index
    %c4 = arith.constant 4 : index
    %30 = vector.load %arg3[%c0_34, %c0_35, %c0_36, %c4] : memref<1x1x4x392xf32, #tpu.memory_space<vmem>>, vector<1x1x4x384xf32>
    %31 = vector.shape_cast %30 : vector<1x1x4x384xf32> to vector<4x384xf32>
    %32 = arith.mulf %1, %31 : vector<4x384xf32>
    %cst_37 = arith.constant dense<0.000000e+00> : vector<384xf32>
    %33 = vector.multi_reduction <add>, %32, %cst_37 [0] : vector<4x384xf32> to vector<384xf32>
    %c0_38 = arith.constant 0 : index
    %c0_39 = arith.constant 0 : index
    %c4_40 = arith.constant 4 : index
    %c0_41 = arith.constant 0 : index
    %34 = vector.load %arg4[%c0_38, %c0_39, %c4_40, %c0_41] : memref<1x1x9x384xf32, #tpu.memory_space<vmem>>, vector<1x1x1x384xf32>
    %35 = vector.shape_cast %34 : vector<1x1x1x384xf32> to vector<384xf32>
    %36 = vector.shape_cast %33 : vector<384xf32> to vector<1x1x1x384xf32>
    tpu.vector_store %arg4[%c0_38, %c0_39, %c4_40, %c0_41], %36 {strides = array<i32>} : memref<1x1x9x384xf32, #tpu.memory_space<vmem>>, vector<1x1x1x384xf32>,
    %c0_42 = arith.constant 0 : index
    %c0_43 = arith.constant 0 : index
    %c0_44 = arith.constant 0 : index
    %c5 = arith.constant 5 : index
    %37 = vector.load %arg3[%c0_42, %c0_43, %c0_44, %c5] : memref<1x1x4x392xf32, #tpu.memory_space<vmem>>, vector<1x1x4x384xf32>
    %38 = vector.shape_cast %37 : vector<1x1x4x384xf32> to vector<4x384xf32>
    %39 = arith.mulf %1, %38 : vector<4x384xf32>
    %cst_45 = arith.constant dense<0.000000e+00> : vector<384xf32>
    %40 = vector.multi_reduction <add>, %39, %cst_45 [0] : vector<4x384xf32> to vector<384xf32>
    %c0_46 = arith.constant 0 : index
    %c0_47 = arith.constant 0 : index
    %c5_48 = arith.constant 5 : index
    %c0_49 = arith.constant 0 : index
    %41 = vector.load %arg4[%c0_46, %c0_47, %c5_48, %c0_49] : memref<1x1x9x384xf32, #tpu.memory_space<vmem>>, vector<1x1x1x384xf32>
    %42 = vector.shape_cast %41 : vector<1x1x1x384xf32> to vector<384xf32>
    %43 = vector.shape_cast %40 : vector<384xf32> to vector<1x1x1x384xf32>
    tpu.vector_store %arg4[%c0_46, %c0_47, %c5_48, %c0_49], %43 {strides = array<i32>} : memref<1x1x9x384xf32, #tpu.memory_space<vmem>>, vector<1x1x1x384xf32>,
    %c0_50 = arith.constant 0 : index
    %c0_51 = arith.constant 0 : index
    %c0_52 = arith.constant 0 : index
    %c6 = arith.constant 6 : index
    %44 = vector.load %arg3[%c0_50, %c0_51, %c0_52, %c6] : memref<1x1x4x392xf32, #tpu.memory_space<vmem>>, vector<1x1x4x384xf32>
    %45 = vector.shape_cast %44 : vector<1x1x4x384xf32> to vector<4x384xf32>
    %46 = arith.mulf %1, %45 : vector<4x384xf32>
    %cst_53 = arith.constant dense<0.000000e+00> : vector<384xf32>
    %47 = vector.multi_reduction <add>, %46, %cst_53 [0] : vector<4x384xf32> to vector<384xf32>
    %c0_54 = arith.constant 0 : index
    %c0_55 = arith.constant 0 : index
    %c6_56 = arith.constant 6 : index
    %c0_57 = arith.constant 0 : index
    %48 = vector.load %arg4[%c0_54, %c0_55, %c6_56, %c0_57] : memref<1x1x9x384xf32, #tpu.memory_space<vmem>>, vector<1x1x1x384xf32>
    %49 = vector.shape_cast %48 : vector<1x1x1x384xf32> to vector<384xf32>
    %50 = vector.shape_cast %47 : vector<384xf32> to vector<1x1x1x384xf32>
    tpu.vector_store %arg4[%c0_54, %c0_55, %c6_56, %c0_57], %50 {strides = array<i32>} : memref<1x1x9x384xf32, #tpu.memory_space<vmem>>, vector<1x1x1x384xf32>,
    %c0_58 = arith.constant 0 : index
    %c0_59 = arith.constant 0 : index
    %c0_60 = arith.constant 0 : index
    %c7 = arith.constant 7 : index
    %51 = vector.load %arg3[%c0_58, %c0_59, %c0_60, %c7] : memref<1x1x4x392xf32, #tpu.memory_space<vmem>>, vector<1x1x4x384xf32>
    %52 = vector.shape_cast %51 : vector<1x1x4x384xf32> to vector<4x384xf32>
    %53 = arith.mulf %1, %52 : vector<4x384xf32>
    %cst_61 = arith.constant dense<0.000000e+00> : vector<384xf32>
    %54 = vector.multi_reduction <add>, %53, %cst_61 [0] : vector<4x384xf32> to vector<384xf32>
    %c0_62 = arith.constant 0 : index
    %c0_63 = arith.constant 0 : index
    %c7_64 = arith.constant 7 : index
    %c0_65 = arith.constant 0 : index
    %55 = vector.load %arg4[%c0_62, %c0_63, %c7_64, %c0_65] : memref<1x1x9x384xf32, #tpu.memory_space<vmem>>, vector<1x1x1x384xf32>
    %56 = vector.shape_cast %55 : vector<1x1x1x384xf32> to vector<384xf32>
    %57 = vector.shape_cast %54 : vector<384xf32> to vector<1x1x1x384xf32>
    tpu.vector_store %arg4[%c0_62, %c0_63, %c7_64, %c0_65], %57 {strides = array<i32>} : memref<1x1x9x384xf32, #tpu.memory_space<vmem>>, vector<1x1x1x384xf32>,
    %c0_66 = arith.constant 0 : index
    %c0_67 = arith.constant 0 : index
    %c0_68 = arith.constant 0 : index
    %c8 = arith.constant 8 : index
    %58 = vector.load %arg3[%c0_66, %c0_67, %c0_68, %c8] : memref<1x1x4x392xf32, #tpu.memory_space<vmem>>, vector<1x1x4x384xf32>
    %59 = vector.shape_cast %58 : vector<1x1x4x384xf32> to vector<4x384xf32>
    %60 = arith.mulf %1, %59 : vector<4x384xf32>
    %cst_69 = arith.constant dense<0.000000e+00> : vector<384xf32>
    %61 = vector.multi_reduction <add>, %60, %cst_69 [0] : vector<4x384xf32> to vector<384xf32>
    %c0_70 = arith.constant 0 : index
    %c0_71 = arith.constant 0 : index
    %c8_72 = arith.constant 8 : index
    %c0_73 = arith.constant 0 : index
    %62 = vector.load %arg4[%c0_70, %c0_71, %c8_72, %c0_73] : memref<1x1x9x384xf32, #tpu.memory_space<vmem>>, vector<1x1x1x384xf32>
    %63 = vector.shape_cast %62 : vector<1x1x1x384xf32> to vector<384xf32>
    %64 = vector.shape_cast %61 : vector<384xf32> to vector<1x1x1x384xf32>
    tpu.vector_store %arg4[%c0_70, %c0_71, %c8_72, %c0_73], %64 {strides = array<i32>} : memref<1x1x9x384xf32, #tpu.memory_space<vmem>>, vector<1x1x1x384xf32>,
    return
  }
  func.func @transform_0(%arg0: i32, %arg1: i32) -> (i32, i32, i32) {
    %c0_i32 = arith.constant 0 : i32
    %c0_i32_0 = arith.constant 0 : i32
    %c0_i32_1 = arith.constant 0 : i32
    return %arg0, %c0_i32, %c0_i32_0 : i32, i32, i32
  }
  func.func @transform_1(%arg0: i32, %arg1: i32) -> (i32, i32, i32, i32) {
    %c0_i32 = arith.constant 0 : i32
    %c0_i32_0 = arith.constant 0 : i32
    %c0_i32_1 = arith.constant 0 : i32
    return %arg0, %arg1, %c0_i32, %c0_i32_0 : i32, i32, i32, i32
  }
  func.func @transform_2(%arg0: i32, %arg1: i32) -> (i32, i32, i32, i32) {
    %c0_i32 = arith.constant 0 : i32
    %c0_i32_0 = arith.constant 0 : i32
    %c0_i32_1 = arith.constant 0 : i32
    return %arg0, %arg1, %c0_i32, %c0_i32_0 : i32, i32, i32, i32
  }
}

</mosaic_0001>

<llo_original>
// kernel: tpu_custom_call.1
$region0: #{tpu_custom_call.1}
  #allocation0 [shape = 'u32[]', space=smem, size = 0x4, offset = 0x4, fixed_abs, tag = 'smem constant byte address 0x4 - core index']
  #allocation1 [shape = 'u32[144,128]{1,0:T(1,128)}', space=vmem, size = 0x12000, scoped, tag = 'internal scratch']
  %s0 = inlined_call_operand.hbm [shape: f32[2,4,384], index: 0, kind: input, shape index: {}]
  %s1 = inlined_call_operand.hbm [shape: f32[2,9,4,392], index: 1, kind: input, shape index: {}]
  %s2 = inlined_call_operand.vmem [shape: f32[2,9,9,384], index: 2, kind: output, shape index: {}]
  %s3 = sld [smem:[#allocation0]]
  $region49: #{tpu_custom_call.1} parent=0
    _
  %s5 = ssub.s32 1, %s3
  %s6 = scalar_select 0, %s5, %s3
  $region1: #{tpu_custom_call.1} parent=0
    #allocation2 [shape = 'u8[12288]{0}', space=vmem, size = 0x3000, scoped, tag = 'input window, operand 0']
    #allocation3 [shape = 's32[2]{0}', space=sflag, size = 0x8, scoped, tag = 'scoped memory for tpu_custom_call.1']
    #allocation4 [shape = 'u8[16384]{0}', space=vmem, size = 0x4000, scoped, tag = 'input window, operand 1']
    #allocation5 [shape = 's32[2]{0}', space=sflag, size = 0x8, scoped, tag = 'scoped memory for tpu_custom_call.1']
    %7 = vsyncpa [#allocation3], 0
    %s8 = scalar_lea.sflag [#allocation3], 1
    %9 = vsyncpa %s8, 0
    %10 = vsyncpa [#allocation5], 0
    %s11 = scalar_lea.sflag [#allocation5], 1
    %12 = vsyncpa %s11, 0
    loop: start=0, step=1, limit=20
    $region2: #{tpu_custom_call.1} parent=1 // loop_pre_header
      _
    $region3: #{tpu_custom_call.1} parent=1 // loop_header
      %s14 = sphi 0, %s18
      %p15 = scmp.ge.s32.totalorder %s14, 20
      %s21 = sphi 0, %s33
      %s22 = sphi 0, %s29
      %s23 = sphi 0, %s21
      %s24 = sphi 0, %s22
      %s25 = sphi 0, %s23
      %s26 = sphi 0, %s24
      %s36 = sphi 0, %s38
      %s39 = sphi 0, %s36
      %s40 = sphi 0, %s39
      %s56 = sphi 0, %s40
      %s64 = sphi 0, %s66
      %s67 = sphi 0, %s64
      %s68 = sphi 0, %s67
      %s84 = sphi 0, %s68
      %s92 = sphi 0, %s94
      %s95 = sphi 0, %s92
      %s96 = sphi 0, %s95
      %s112 = sphi 0, %s96
    $region4: #{tpu_custom_call.1} parent=1 // loop_header_branch
      %17 = sbr.rel (%p15) target = $region8
    $region5: #{tpu_custom_call.1} parent=1 // loop_body
      %s19 = ssub.s32 %s14, 1
      %s20 = ssub.s32 %s14, 2
      %s27 = sadd.s32 1, %s22
      %p28 = scmp.ge.s32.totalorder %s27, 9
      %s29 = scalar_select %p28, 0, %s27
      %s30 = sadd.s32 1, %s21
      %s31 = scalar_select %p28, %s30, %s21
      %p32 = scmp.ge.s32.totalorder %s31, 2
      %s33 = scalar_select %p32, 0, %s31
      %s34 = ssub.s32 %s21, %s33
      %p35 = scmp.eq.s32.totalorder %s34, 0
      %s37 = sadd.s32 %s36, 1
      %s38 = scalar_select %p35, %s36, %s37
      %p41 = pneg %p35
      %p42 = scmp.eq.s32.totalorder %s14, 17
      %p43 = por %p41, %p42
      %p44 = scmp.ne.s32.totalorder %s36, %s39
      %p45 = scmp.eq.s32.totalorder %s14, 0
      %p46 = por %p44, %p45
      %p47 = scmp.ne.s32.totalorder %s36, %s39
      %p48 = scmp.eq.s32.totalorder %s19, 17
      %p49 = por %p47, %p48
      %p50 = scmp.ne.s32.totalorder %s39, %s40
      %p51 = scmp.eq.s32.totalorder %s19, 0
      %p52 = por %p50, %p51
      %p53 = scmp.ne.s32.totalorder %s39, %s40
      %p54 = scmp.eq.s32.totalorder %s20, 17
      %p55 = por %p53, %p54
      %p57 = scmp.ne.s32.totalorder %s40, %s56
      %p58 = scmp.eq.s32.totalorder %s20, 0
      %p59 = por %p57, %p58
      %s60 = ssub.s32 %s21, %s33
      %s61 = ssub.s32 %s22, %s29
      %s62 = sor.u32 %s60, %s61
      %p63 = scmp.eq.s32.totalorder %s62, 0
      %s65 = sadd.s32 %s64, 1
      %s66 = scalar_select %p63, %s64, %s65
      %p69 = pneg %p63
      %p70 = scmp.eq.s32.totalorder %s14, 17
      %p71 = por %p69, %p70
      %p72 = scmp.ne.s32.totalorder %s64, %s67
      %p73 = scmp.eq.s32.totalorder %s14, 0
      %p74 = por %p72, %p73
      %p75 = scmp.ne.s32.totalorder %s64, %s67
      %p76 = scmp.eq.s32.totalorder %s19, 17
      %p77 = por %p75, %p76
      %p78 = scmp.ne.s32.totalorder %s67, %s68
      %p79 = scmp.eq.s32.totalorder %s19, 0
      %p80 = por %p78, %p79
      %p81 = scmp.ne.s32.totalorder %s67, %s68
      %p82 = scmp.eq.s32.totalorder %s20, 17
      %p83 = por %p81, %p82
      %p85 = scmp.ne.s32.totalorder %s68, %s84
      %p86 = scmp.eq.s32.totalorder %s20, 0
      %p87 = por %p85, %p86
      %s88 = ssub.s32 %s21, %s33
      %s89 = ssub.s32 %s22, %s29
      %s90 = sor.u32 %s88, %s89
      %p91 = scmp.eq.s32.totalorder %s90, 0
      %s93 = sadd.s32 %s92, 1
      %s94 = scalar_select %p91, %s92, %s93
      %p97 = pneg %p91
      %p98 = scmp.eq.s32.totalorder %s14, 17
      %p99 = por %p97, %p98
      %p100 = scmp.ne.s32.totalorder %s92, %s95
      %p101 = scmp.eq.s32.totalorder %s14, 0
      %p102 = por %p100, %p101
      %p103 = scmp.ne.s32.totalorder %s92, %s95
      %p104 = scmp.eq.s32.totalorder %s19, 17
      %p105 = por %p103, %p104
      %p106 = scmp.ne.s32.totalorder %s95, %s96
      %p107 = scmp.eq.s32.totalorder %s19, 0
      %p108 = por %p106, %p107
      %p109 = scmp.ne.s32.totalorder %s95, %s96
      %p110 = scmp.eq.s32.totalorder %s20, 17
      %p111 = por %p109, %p110
      %p113 = scmp.ne.s32.totalorder %s96, %s112
      %p114 = scmp.eq.s32.totalorder %s20, 0
      %p115 = por %p113, %p114
      %p116 = scmp.le.s32.totalorder 1, %s14
      %p117 = scmp.lt.s32.totalorder %s14, 19
      %p118 = pnand %p116, %p117
      %p119 = pneg %p118
      // Predicated region
      $region9: #{tpu_custom_call.1} parent=5 // pred_check
        _
      $region10: #{tpu_custom_call.1} parent=5 // pred_check_branch
        %121 = sbr.rel (%p118) target = $region12
      $region11: #{tpu_custom_call.1} parent=5 // pred_region
        %s122 = ssub.s32 %s14, 1
      $region12: #{tpu_custom_call.1} parent=5 // pred_fallthru
        _
      %p123 = scmp.lt.s32.totalorder %s14, 18
      // Predicated region
      $region13: #{tpu_custom_call.1} parent=5 // pred_check
        %p124 = pneg %p123
      $region14: #{tpu_custom_call.1} parent=5 // pred_check_branch
        %126 = sbr.rel (%p124) target = $region16
      $region15: #{tpu_custom_call.1} parent=5 // pred_region
        // Predicated region
        $region17: #{tpu_custom_call.1} parent=15 // pred_check
          %p127 = pneg %p46
        $region18: #{tpu_custom_call.1} parent=15 // pred_check_branch
          %129 = sbr.rel (%p127) target = $region20
        $region19: #{tpu_custom_call.1} parent=15 // pred_region
          %s130 = sand.u32 %s36, 1
          %s131 = scalar_lea.sflag [#allocation3], %s130
          %s132 = sand.u32 %s36, 1
          %s133 = smul.addr %s132, 12
          %s134 = scalar_lea.vmem [#allocation2], %s133
          %s136 = ssub.s32 192, 192
          %137 = vsyncadd %s131, %s136
          %s138 = smul.addr %s21, 3
          %s139 = smul.addr %s138, 64
          %s140 = scalar_lea.hbm %s0, %s139
          %s142 = sshll.u32 %s134, 4
          %s143 = int_to_ptr.vmem [resolvable:$true] %s142
          %145 = dma.hbm_to_vmem [thread:$0]  %s140, 192, %s143, %s131
        $region20: #{tpu_custom_call.1} parent=15 // pred_fallthru
          _
        // Predicated region
        $region21: #{tpu_custom_call.1} parent=15 // pred_check
          %p146 = pneg %p74
        $region22: #{tpu_custom_call.1} parent=15 // pred_check_branch
          %148 = sbr.rel (%p146) target = $region24
        $region23: #{tpu_custom_call.1} parent=15 // pred_region
          %s149 = sand.u32 %s64, 1
          %s150 = scalar_lea.sflag [#allocation5], %s149
          %s151 = sand.u32 %s64, 1
          %s152 = smul.addr %s151, 16
          %s153 = scalar_lea.vmem [#allocation4], %s152
          %s155 = ssub.s32 256, 256
          %156 = vsyncadd %s150, %s155
          %s157 = smul.addr %s22, 4
          %s158 = smul.addr %s21, 36
          %s159 = sadd.s32 %s157, %s158
          %s160 = smul.addr %s159, 64
          %s161 = scalar_lea.hbm %s1, %s160
          %s163 = sshll.u32 %s153, 4
          %s164 = int_to_ptr.vmem [resolvable:$true] %s163
          %166 = dma.hbm_to_vmem [thread:$0]  %s161, 256, %s164, %s150
        $region24: #{tpu_custom_call.1} parent=15 // pred_fallthru
          _
      $region16: #{tpu_custom_call.1} parent=5 // pred_fallthru
        _
      %p167 = scmp.le.s32.totalorder 1, %s14
      %p168 = scmp.lt.s32.totalorder %s14, 19
      %p169 = pnand %p167, %p168
      %p170 = pneg %p169
      // Predicated region
      $region25: #{tpu_custom_call.1} parent=5 // pred_check
        _
      $region26: #{tpu_custom_call.1} parent=5 // pred_check_branch
        %172 = sbr.rel (%p169) target = $region28
      $region27: #{tpu_custom_call.1} parent=5 // pred_region
        %s173 = ssub.s32 %s14, 1
        %s174 = sand.u32 %s39, 1
        %s175 = scalar_lea.sflag [#allocation3], %s174
        %s176 = sand.u32 %s39, 1
        %s177 = smul.addr %s176, 12
        %s178 = scalar_lea.vmem [#allocation2], %s177
        // Predicated region
        $region29: #{tpu_custom_call.1} parent=27 // pred_check
          %p179 = pneg %p52
        $region30: #{tpu_custom_call.1} parent=27 // pred_check_branch
          %181 = sbr.rel (%p179) target = $region32
        $region31: #{tpu_custom_call.1} parent=27 // pred_region
          %182 = dma.done %s175, 192
        $region32: #{tpu_custom_call.1} parent=27 // pred_fallthru
          _
        %s183 = sand.u32 %s67, 1
        %s184 = scalar_lea.sflag [#allocation5], %s183
        %s185 = sand.u32 %s67, 1
        %s186 = smul.addr %s185, 16
        %s187 = scalar_lea.vmem [#allocation4], %s186
        // Predicated region
        $region33: #{tpu_custom_call.1} parent=27 // pred_check
          %p188 = pneg %p80
        $region34: #{tpu_custom_call.1} parent=27 // pred_check_branch
          %190 = sbr.rel (%p188) target = $region36
        $region35: #{tpu_custom_call.1} parent=27 // pred_region
          %191 = dma.done %s184, 256
        $region36: #{tpu_custom_call.1} parent=27 // pred_fallthru
          _
        %s192 = sand.u32 %s39, 1
        %s193 = scalar_lea.sflag [#allocation3], %s192
        %s194 = sand.u32 %s39, 1
        %s195 = smul.addr %s194, 12
        %s196 = scalar_lea.vmem [#allocation2], %s195
        %p197 = pneg %p52
        %p198 = pneg %p49
        %s199 = sand.u32 %s67, 1
        %s200 = scalar_lea.sflag [#allocation5], %s199
        %s201 = sand.u32 %s67, 1
        %s202 = smul.addr %s201, 16
        %s203 = scalar_lea.vmem [#allocation4], %s202
        %p204 = pneg %p80
        %p205 = pneg %p77
        %p206 = pneg %p108
        %p207 = pneg %p105
        %p208 = scmp.lt.s32.totalorder %s23, 1
        %s209 = scalar_select %p208, %s23, 1
        %p210 = scmp.lt.s32.totalorder %s24, 8
        %s211 = scalar_select %p210, %s24, 8
        %s212 = smul.addr %s211, 6
        %s213 = smul.addr %s209, 54
        %s214 = sadd.s32 %s212, %s213
        %s215 = smul.addr %s214, 8
        %s216 = scalar_lea.vmem %s2, %s215
        %p217 = scmp.lt.s32.totalorder %s23, 1
        %s218 = scalar_select %p217, %s23, 1
        %p219 = scmp.lt.s32.totalorder %s24, 8
        %s220 = scalar_select %p219, %s24, 8
        %s221 = smul.addr %s220, 6
        %s222 = smul.addr %s218, 54
        %s223 = sadd.s32 %s221, %s222
        %s224 = smul.addr %s223, 8
        %s225 = scalar_lea.vmem %s2, %s224
        %v226 = vld [vmem:[%s178] sm:$0xff]
        %v227 = vld [vmem:[%s178 + $0x8] sm:$0xf]
        %v228 = vld [vmem:[%s187] sm:$0xff]
        %v229 = vld [vmem:[%s187 + $0x8] sm:$0xf]
        %v230 = vmul.f32 %v226, %v228
        %v231 = vmul.f32 %v227, %v229
        %v233 = vcombine.high %v230, %v230
        %vm235 = vcmask 1043456
        %v236 = vsel %vm235, %v230, 0.0
        %v237 = vrot.slane %v236, 4
        %v238 = vadd.f32 %v236, %v237
        %v239 = vrot.slane %v238, 2
        %v240 = vadd.f32 %v238, %v239
        %v241 = vrot.slane %v240, 1
        %v242 = vadd.f32 %v240, %v241
        %v243 = vsel %vm235, %v233, 0.0
        %v244 = vrot.slane %v243, 4
        %v245 = vadd.f32 %v243, %v244
        %v246 = vrot.slane %v245, 2
        %v247 = vadd.f32 %v245, %v246
        %v248 = vrot.slane %v247, 1
        %v249 = vadd.f32 %v247, %v248
        %v250 = vsel %vm235, %v231, 0.0
        %v251 = vrot.slane %v250, 4
        %v252 = vadd.f32 %v250, %v251
        %v253 = vrot.slane %v252, 2
        %v254 = vadd.f32 %v252, %v253
        %v255 = vrot.slane %v254, 1
        %v256 = vadd.f32 %v254, %v255
        %v260 = vcombine.low %v242, %v249
        %v262 = vunpack.c.l.s4 1966171168
        %v263 = vunpack.c.0.s8 %v262
        %v264 = vlaneseq
        %v265 = vshrl.u32 %v264, 7
        %v266 = vsub.s32 %v263, %v265
        %v267 = vrot.slane %v260, %v266
        %v269 = vunpack.c.l.s4 1966171168
        %v270 = vunpack.c.0.s8 %v269
        %v271 = vlaneseq
        %v272 = vshrl.u32 %v271, 7
        %v273 = vsub.s32 %v270, %v272
        %v274 = vrot.slane %v256, %v273
        %v275 = vcombine.low %v267, %v274
        %v277 = vunpack.c.l.s4 1966171168
        %v278 = vunpack.c.0.s8 %v277
        %v279 = vlaneseq
        %v280 = vshrl.u32 %v279, 7
        %v281 = vsub.s32 %v278, %v280
        %v282 = vrot.slane %v275, %v281
        %v284 = vlaneseq
        %vm285 = vcmp.ge.s32.totalorder %v284, 0
        %vm286 = vcmp.lt.s32.totalorder %v284, 384
        %vm287 = vmand %vm285, %vm286
        %288 = vst.msk [vmem:[%s225] ss:$8 sm:$0x7] %vm287, %v282
        %289 = vst.msk [vmem:[%s225] ss:$8 sm:$0x0] %vm287, %v282
        %v290 = vld [vmem:[%s187] sm:$0xff]
        %v291 = vld [vmem:[%s187 + $0x8] sm:$0xff]
        %294 = vrot.lane.b32.xlu0 %v290, 127
        %v295 = vpop.permute.xlu0 %294
        %296 = vrot.lane.b32.xlu0 %v291, 127
        %v297 = vpop.permute.xlu0 %296
        %v298 = vrot.slane %v295, 4
        %v299 = vrot.slane %v297, 4
        %v300 = vsel %vm235, %v298, %v299
        %vm301 = vcmask 1039360
        %v302 = vsel %vm301, %v295, %v300
        %v303 = vsel %vm301, %v297, %v299
        %v306 = vmul.f32 %v226, %v302
        %v307 = vmul.f32 %v227, %v303
        %v309 = vcombine.high %v306, %v306
        %v311 = vsel %vm235, %v306, 0.0
        %v312 = vrot.slane %v311, 4
        %v313 = vadd.f32 %v311, %v312
        %v314 = vrot.slane %v313, 2
        %v315 = vadd.f32 %v313, %v314
        %v316 = vrot.slane %v315, 1
        %v317 = vadd.f32 %v315, %v316
        %v318 = vsel %vm235, %v309, 0.0
        %v319 = vrot.slane %v318, 4
        %v320 = vadd.f32 %v318, %v319
        %v321 = vrot.slane %v320, 2
        %v322 = vadd.f32 %v320, %v321
        %v323 = vrot.slane %v322, 1
        %v324 = vadd.f32 %v322, %v323
        %v325 = vsel %vm235, %v307, 0.0
        %v326 = vrot.slane %v325, 4
        %v327 = vadd.f32 %v325, %v326
        %v328 = vrot.slane %v327, 2
        %v329 = vadd.f32 %v327, %v328
        %v330 = vrot.slane %v329, 1
        %v331 = vadd.f32 %v329, %v330
        %v335 = vcombine.low %v317, %v324
        %v337 = vunpack.c.l.s4 1966171168
        %v338 = vunpack.c.0.s8 %v337
        %v339 = vlaneseq
        %v340 = vshrl.u32 %v339, 7
        %v341 = vsub.s32 %v338, %v340
        %v342 = vrot.slane %v335, %v341
        %v344 = vunpack.c.l.s4 1966171168
        %v345 = vunpack.c.0.s8 %v344
        %v346 = vlaneseq
        %v347 = vshrl.u32 %v346, 7
        %v348 = vsub.s32 %v345, %v347
        %v349 = vrot.slane %v331, %v348
        %v350 = vcombine.low %v342, %v349
        %v352 = vunpack.c.l.s4 1966171168
        %v353 = vunpack.c.0.s8 %v352
        %v354 = vlaneseq
        %v355 = vshrl.u32 %v354, 7
        %v356 = vsub.s32 %v353, %v355
        %v357 = vrot.slane %v350, %v356
        %s359 = scalar_lea.vmem %s225, 1
        %360 = vst.msk [vmem:[%s359] ss:$8 sm:$0x7] %vm287, %v357
        %361 = vst.msk [vmem:[%s359] ss:$8 sm:$0x0] %vm287, %v357
        %v362 = vld [vmem:[%s187] sm:$0xff]
        %v363 = vld [vmem:[%s187 + $0x8] sm:$0xff]
        %366 = vrot.lane.b32.xlu0 %v362, 126
        %v367 = vpop.permute.xlu0 %366
        %368 = vrot.lane.b32.xlu0 %v363, 126
        %v369 = vpop.permute.xlu0 %368
        %v370 = vrot.slane %v367, 4
        %v371 = vrot.slane %v369, 4
        %v372 = vsel %vm235, %v370, %v371
        %vm373 = vcmask 1031168
        %v374 = vsel %vm373, %v367, %v372
        %v375 = vsel %vm373, %v369, %v371
        %v378 = vmul.f32 %v226, %v374
        %v379 = vmul.f32 %v227, %v375
        %v381 = vcombine.high %v378, %v378
        %v383 = vsel %vm235, %v378, 0.0
        %v384 = vrot.slane %v383, 4
        %v385 = vadd.f32 %v383, %v384
        %v386 = vrot.slane %v385, 2
        %v387 = vadd.f32 %v385, %v386
        %v388 = vrot.slane %v387, 1
        %v389 = vadd.f32 %v387, %v388
        %v390 = vsel %vm235, %v381, 0.0
        %v391 = vrot.slane %v390, 4
        %v392 = vadd.f32 %v390, %v391
        %v393 = vrot.slane %v392, 2
        %v394 = vadd.f32 %v392, %v393
        %v395 = vrot.slane %v394, 1
        %v396 = vadd.f32 %v394, %v395
        %v397 = vsel %vm235, %v379, 0.0
        %v398 = vrot.slane %v397, 4
        %v399 = vadd.f32 %v397, %v398
        %v400 = vrot.slane %v399, 2
        %v401 = vadd.f32 %v399, %v400
        %v402 = vrot.slane %v401, 1
        %v403 = vadd.f32 %v401, %v402
        %v407 = vcombine.low %v389, %v396
        %v409 = vunpack.c.l.s4 1966171168
        %v410 = vunpack.c.0.s8 %v409
        %v411 = vlaneseq
        %v412 = vshrl.u32 %v411, 7
        %v413 = vsub.s32 %v410, %v412
        %v414 = vrot.slane %v407, %v413
        %v416 = vunpack.c.l.s4 1966171168
        %v417 = vunpack.c.0.s8 %v416
        %v418 = vlaneseq
        %v419 = vshrl.u32 %v418, 7
        %v420 = vsub.s32 %v417, %v419
        %v421 = vrot.slane %v403, %v420
        %v422 = vcombine.low %v414, %v421
        %v424 = vunpack.c.l.s4 1966171168
        %v425 = vunpack.c.0.s8 %v424
        %v426 = vlaneseq
        %v427 = vshrl.u32 %v426, 7
        %v428 = vsub.s32 %v425, %v427
        %v429 = vrot.slane %v422, %v428
        %s431 = scalar_lea.vmem %s225, 2
        %432 = vst.msk [vmem:[%s431] ss:$8 sm:$0x7] %vm287, %v429
        %433 = vst.msk [vmem:[%s431] ss:$8 sm:$0x0] %vm287, %v429
        %v434 = vld [vmem:[%s187] sm:$0xff]
        %v435 = vld [vmem:[%s187 + $0x8] sm:$0xff]
        %438 = vrot.lane.b32.xlu0 %v434, 125
        %v439 = vpop.permute.xlu0 %438
        %440 = vrot.lane.b32.xlu0 %v435, 125
        %v441 = vpop.permute.xlu0 %440
        %v442 = vrot.slane %v439, 4
        %v443 = vrot.slane %v441, 4
        %v444 = vsel %vm235, %v442, %v443
        %vm445 = vcmask 1022976
        %v446 = vsel %vm445, %v439, %v444
        %v447 = vsel %vm445, %v441, %v443
        %v450 = vmul.f32 %v226, %v446
        %v451 = vmul.f32 %v227, %v447
        %v453 = vcombine.high %v450, %v450
        %v455 = vsel %vm235, %v450, 0.0
        %v456 = vrot.slane %v455, 4
        %v457 = vadd.f32 %v455, %v456
        %v458 = vrot.slane %v457, 2
        %v459 = vadd.f32 %v457, %v458
        %v460 = vrot.slane %v459, 1
        %v461 = vadd.f32 %v459, %v460
        %v462 = vsel %vm235, %v453, 0.0
        %v463 = vrot.slane %v462, 4
        %v464 = vadd.f32 %v462, %v463
        %v465 = vrot.slane %v464, 2
        %v466 = vadd.f32 %v464, %v465
        %v467 = vrot.slane %v466, 1
        %v468 = vadd.f32 %v466, %v467
        %v469 = vsel %vm235, %v451, 0.0
        %v470 = vrot.slane %v469, 4
        %v471 = vadd.f32 %v469, %v470
        %v472 = vrot.slane %v471, 2
        %v473 = vadd.f32 %v471, %v472
        %v474 = vrot.slane %v473, 1
        %v475 = vadd.f32 %v473, %v474
        %v479 = vcombine.low %v461, %v468
        %v481 = vunpack.c.l.s4 1966171168
        %v482 = vunpack.c.0.s8 %v481
        %v483 = vlaneseq
        %v484 = vshrl.u32 %v483, 7
        %v485 = vsub.s32 %v482, %v484
        %v486 = vrot.slane %v479, %v485
        %v488 = vunpack.c.l.s4 1966171168
        %v489 = vunpack.c.0.s8 %v488
        %v490 = vlaneseq
        %v491 = vshrl.u32 %v490, 7
        %v492 = vsub.s32 %v489, %v491
        %v493 = vrot.slane %v475, %v492
        %v494 = vcombine.low %v486, %v493
        %v496 = vunpack.c.l.s4 1966171168
        %v497 = vunpack.c.0.s8 %v496
        %v498 = vlaneseq
        %v499 = vshrl.u32 %v498, 7
        %v500 = vsub.s32 %v497, %v499
        %v501 = vrot.slane %v494, %v500
        %s503 = scalar_lea.vmem %s225, 3
        %504 = vst.msk [vmem:[%s503] ss:$8 sm:$0x7] %vm287, %v501
        %505 = vst.msk [vmem:[%s503] ss:$8 sm:$0x0] %vm287, %v501
        %v506 = vld [vmem:[%s187] sm:$0xff]
        %v507 = vld [vmem:[%s187 + $0x8] sm:$0xff]
        %510 = vrot.lane.b32.xlu0 %v506, 124
        %v511 = vpop.permute.xlu0 %510
        %512 = vrot.lane.b32.xlu0 %v507, 124
        %v513 = vpop.permute.xlu0 %512
        %v514 = vrot.slane %v511, 4
        %v515 = vrot.slane %v513, 4
        %v516 = vsel %vm235, %v514, %v515
        %vm517 = vcmask 1014784
        %v518 = vsel %vm517, %v511, %v516
        %v519 = vsel %vm517, %v513, %v515
        %v522 = vmul.f32 %v226, %v518
        %v523 = vmul.f32 %v227, %v519
        %v525 = vcombine.high %v522, %v522
        %v527 = vsel %vm235, %v522, 0.0
        %v528 = vrot.slane %v527, 4
        %v529 = vadd.f32 %v527, %v528
        %v530 = vrot.slane %v529, 2
        %v531 = vadd.f32 %v529, %v530
        %v532 = vrot.slane %v531, 1
        %v533 = vadd.f32 %v531, %v532
        %v534 = vsel %vm235, %v525, 0.0
        %v535 = vrot.slane %v534, 4
        %v536 = vadd.f32 %v534, %v535
        %v537 = vrot.slane %v536, 2
        %v538 = vadd.f32 %v536, %v537
        %v539 = vrot.slane %v538, 1
        %v540 = vadd.f32 %v538, %v539
        %v541 = vsel %vm235, %v523, 0.0
        %v542 = vrot.slane %v541, 4
        %v543 = vadd.f32 %v541, %v542
        %v544 = vrot.slane %v543, 2
        %v545 = vadd.f32 %v543, %v544
        %v546 = vrot.slane %v545, 1
        %v547 = vadd.f32 %v545, %v546
        %v551 = vcombine.low %v533, %v540
        %v553 = vunpack.c.l.s4 1966171168
        %v554 = vunpack.c.0.s8 %v553
        %v555 = vlaneseq
        %v556 = vshrl.u32 %v555, 7
        %v557 = vsub.s32 %v554, %v556
        %v558 = vrot.slane %v551, %v557
        %v560 = vunpack.c.l.s4 1966171168
        %v561 = vunpack.c.0.s8 %v560
        %v562 = vlaneseq
        %v563 = vshrl.u32 %v562, 7
        %v564 = vsub.s32 %v561, %v563
        %v565 = vrot.slane %v547, %v564
        %v566 = vcombine.low %v558, %v565
        %v568 = vunpack.c.l.s4 1966171168
        %v569 = vunpack.c.0.s8 %v568
        %v570 = vlaneseq
        %v571 = vshrl.u32 %v570, 7
        %v572 = vsub.s32 %v569, %v571
        %v573 = vrot.slane %v566, %v572
        %s575 = scalar_lea.vmem %s225, 4
        %576 = vst.msk [vmem:[%s575] ss:$8 sm:$0x7] %vm287, %v573
        %577 = vst.msk [vmem:[%s575] ss:$8 sm:$0x0] %vm287, %v573
        %v578 = vld [vmem:[%s187] sm:$0xff]
        %v579 = vld [vmem:[%s187 + $0x8] sm:$0xff]
        %582 = vrot.lane.b32.xlu0 %v578, 123
        %v583 = vpop.permute.xlu0 %582
        %584 = vrot.lane.b32.xlu0 %v579, 123
        %v585 = vpop.permute.xlu0 %584
        %v586 = vrot.slane %v583, 4
        %v587 = vrot.slane %v585, 4
        %v588 = vsel %vm235, %v586, %v587
        %vm589 = vcmask 1006592
        %v590 = vsel %vm589, %v583, %v588
        %v591 = vsel %vm589, %v585, %v587
        %v594 = vmul.f32 %v226, %v590
        %v595 = vmul.f32 %v227, %v591
        %v597 = vcombine.high %v594, %v594
        %v599 = vsel %vm235, %v594, 0.0
        %v600 = vrot.slane %v599, 4
        %v601 = vadd.f32 %v599, %v600
        %v602 = vrot.slane %v601, 2
        %v603 = vadd.f32 %v601, %v602
        %v604 = vrot.slane %v603, 1
        %v605 = vadd.f32 %v603, %v604
        %v606 = vsel %vm235, %v597, 0.0
        %v607 = vrot.slane %v606, 4
        %v608 = vadd.f32 %v606, %v607
        %v609 = vrot.slane %v608, 2
        %v610 = vadd.f32 %v608, %v609
        %v611 = vrot.slane %v610, 1
        %v612 = vadd.f32 %v610, %v611
        %v613 = vsel %vm235, %v595, 0.0
        %v614 = vrot.slane %v613, 4
        %v615 = vadd.f32 %v613, %v614
        %v616 = vrot.slane %v615, 2
        %v617 = vadd.f32 %v615, %v616
        %v618 = vrot.slane %v617, 1
        %v619 = vadd.f32 %v617, %v618
        %v623 = vcombine.low %v605, %v612
        %v625 = vunpack.c.l.s4 1966171168
        %v626 = vunpack.c.0.s8 %v625
        %v627 = vlaneseq
        %v628 = vshrl.u32 %v627, 7
        %v629 = vsub.s32 %v626, %v628
        %v630 = vrot.slane %v623, %v629
        %v632 = vunpack.c.l.s4 1966171168
        %v633 = vunpack.c.0.s8 %v632
        %v634 = vlaneseq
        %v635 = vshrl.u32 %v634, 7
        %v636 = vsub.s32 %v633, %v635
        %v637 = vrot.slane %v619, %v636
        %v638 = vcombine.low %v630, %v637
        %v640 = vunpack.c.l.s4 1966171168
        %v641 = vunpack.c.0.s8 %v640
        %v642 = vlaneseq
        %v643 = vshrl.u32 %v642, 7
        %v644 = vsub.s32 %v641, %v643
        %v645 = vrot.slane %v638, %v644
        %s647 = scalar_lea.vmem %s225, 5
        %648 = vst.msk [vmem:[%s647] ss:$8 sm:$0x7] %vm287, %v645
        %649 = vst.msk [vmem:[%s647] ss:$8 sm:$0x0] %vm287, %v645
        %v650 = vld [vmem:[%s187] sm:$0xff]
        %v651 = vld [vmem:[%s187 + $0x8] sm:$0xff]
        %654 = vrot.lane.b32.xlu0 %v650, 122
        %v655 = vpop.permute.xlu0 %654
        %656 = vrot.lane.b32.xlu0 %v651, 122
        %v657 = vpop.permute.xlu0 %656
        %v658 = vrot.slane %v655, 4
        %v659 = vrot.slane %v657, 4
        %v660 = vsel %vm235, %v658, %v659
        %vm661 = vcmask 998400
        %v662 = vsel %vm661, %v655, %v660
        %v663 = vsel %vm661, %v657, %v659
        %v666 = vmul.f32 %v226, %v662
        %v667 = vmul.f32 %v227, %v663
        %v669 = vcombine.high %v666, %v666
        %v671 = vsel %vm235, %v666, 0.0
        %v672 = vrot.slane %v671, 4
        %v673 = vadd.f32 %v671, %v672
        %v674 = vrot.slane %v673, 2
        %v675 = vadd.f32 %v673, %v674
        %v676 = vrot.slane %v675, 1
        %v677 = vadd.f32 %v675, %v676
        %v678 = vsel %vm235, %v669, 0.0
        %v679 = vrot.slane %v678, 4
        %v680 = vadd.f32 %v678, %v679
        %v681 = vrot.slane %v680, 2
        %v682 = vadd.f32 %v680, %v681
        %v683 = vrot.slane %v682, 1
        %v684 = vadd.f32 %v682, %v683
        %v685 = vsel %vm235, %v667, 0.0
        %v686 = vrot.slane %v685, 4
        %v687 = vadd.f32 %v685, %v686
        %v688 = vrot.slane %v687, 2
        %v689 = vadd.f32 %v687, %v688
        %v690 = vrot.slane %v689, 1
        %v691 = vadd.f32 %v689, %v690
        %v695 = vcombine.low %v677, %v684
        %v697 = vunpack.c.l.s4 1966171168
        %v698 = vunpack.c.0.s8 %v697
        %v699 = vlaneseq
        %v700 = vshrl.u32 %v699, 7
        %v701 = vsub.s32 %v698, %v700
        %v702 = vrot.slane %v695, %v701
        %v704 = vunpack.c.l.s4 1966171168
        %v705 = vunpack.c.0.s8 %v704
        %v706 = vlaneseq
        %v707 = vshrl.u32 %v706, 7
        %v708 = vsub.s32 %v705, %v707
        %v709 = vrot.slane %v691, %v708
        %v710 = vcombine.low %v702, %v709
        %v712 = vunpack.c.l.s4 1966171168
        %v713 = vunpack.c.0.s8 %v712
        %v714 = vlaneseq
        %v715 = vshrl.u32 %v714, 7
        %v716 = vsub.s32 %v713, %v715
        %v717 = vrot.slane %v710, %v716
        %s719 = scalar_lea.vmem %s225, 6
        %720 = vst.msk [vmem:[%s719] ss:$8 sm:$0x7] %vm287, %v717
        %721 = vst.msk [vmem:[%s719] ss:$8 sm:$0x0] %vm287, %v717
        %v722 = vld [vmem:[%s187] sm:$0xff]
        %v723 = vld [vmem:[%s187 + $0x8] sm:$0xff]
        %726 = vrot.lane.b32.xlu0 %v722, 121
        %v727 = vpop.permute.xlu0 %726
        %728 = vrot.lane.b32.xlu0 %v723, 121
        %v729 = vpop.permute.xlu0 %728
        %v730 = vrot.slane %v727, 4
        %v731 = vrot.slane %v729, 4
        %v732 = vsel %vm235, %v730, %v731
        %vm733 = vcmask 990208
        %v734 = vsel %vm733, %v727, %v732
        %v735 = vsel %vm733, %v729, %v731
        %v738 = vmul.f32 %v226, %v734
        %v739 = vmul.f32 %v227, %v735
        %v741 = vcombine.high %v738, %v738
        %v743 = vsel %vm235, %v738, 0.0
        %v744 = vrot.slane %v743, 4
        %v745 = vadd.f32 %v743, %v744
        %v746 = vrot.slane %v745, 2
        %v747 = vadd.f32 %v745, %v746
        %v748 = vrot.slane %v747, 1
        %v749 = vadd.f32 %v747, %v748
        %v750 = vsel %vm235, %v741, 0.0
        %v751 = vrot.slane %v750, 4
        %v752 = vadd.f32 %v750, %v751
        %v753 = vrot.slane %v752, 2
        %v754 = vadd.f32 %v752, %v753
        %v755 = vrot.slane %v754, 1
        %v756 = vadd.f32 %v754, %v755
        %v757 = vsel %vm235, %v739, 0.0
        %v758 = vrot.slane %v757, 4
        %v759 = vadd.f32 %v757, %v758
        %v760 = vrot.slane %v759, 2
        %v761 = vadd.f32 %v759, %v760
        %v762 = vrot.slane %v761, 1
        %v763 = vadd.f32 %v761, %v762
        %v767 = vcombine.low %v749, %v756
        %v769 = vunpack.c.l.s4 1966171168
        %v770 = vunpack.c.0.s8 %v769
        %v771 = vlaneseq
        %v772 = vshrl.u32 %v771, 7
        %v773 = vsub.s32 %v770, %v772
        %v774 = vrot.slane %v767, %v773
        %v776 = vunpack.c.l.s4 1966171168
        %v777 = vunpack.c.0.s8 %v776
        %v778 = vlaneseq
        %v779 = vshrl.u32 %v778, 7
        %v780 = vsub.s32 %v777, %v779
        %v781 = vrot.slane %v763, %v780
        %v782 = vcombine.low %v774, %v781
        %v784 = vunpack.c.l.s4 1966171168
        %v785 = vunpack.c.0.s8 %v784
        %v786 = vlaneseq
        %v787 = vshrl.u32 %v786, 7
        %v788 = vsub.s32 %v785, %v787
        %v789 = vrot.slane %v782, %v788
        %s791 = scalar_lea.vmem %s225, 7
        %792 = vst.msk [vmem:[%s791] ss:$8 sm:$0x7] %vm287, %v789
        %793 = vst.msk [vmem:[%s791] ss:$8 sm:$0x0] %vm287, %v789
        %v794 = vld [vmem:[%s187] sm:$0xff]
        %v795 = vld [vmem:[%s187 + $0x8] sm:$0xff]
        %798 = vrot.lane.b32.xlu0 %v794, 120
        %v799 = vpop.permute.xlu0 %798
        %800 = vrot.lane.b32.xlu0 %v795, 120
        %v801 = vpop.permute.xlu0 %800
        %v802 = vrot.slane %v799, 4
        %v803 = vrot.slane %v801, 4
        %v804 = vsel %vm235, %v802, %v803
        %vm805 = vcmask 982016
        %v806 = vsel %vm805, %v799, %v804
        %v807 = vsel %vm805, %v801, %v803
        %v810 = vmul.f32 %v226, %v806
        %v811 = vmul.f32 %v227, %v807
        %v813 = vcombine.high %v810, %v810
        %v815 = vsel %vm235, %v810, 0.0
        %v816 = vrot.slane %v815, 4
        %v817 = vadd.f32 %v815, %v816
        %v818 = vrot.slane %v817, 2
        %v819 = vadd.f32 %v817, %v818
        %v820 = vrot.slane %v819, 1
        %v821 = vadd.f32 %v819, %v820
        %v822 = vsel %vm235, %v813, 0.0
        %v823 = vrot.slane %v822, 4
        %v824 = vadd.f32 %v822, %v823
        %v825 = vrot.slane %v824, 2
        %v826 = vadd.f32 %v824, %v825
        %v827 = vrot.slane %v826, 1
        %v828 = vadd.f32 %v826, %v827
        %v829 = vsel %vm235, %v811, 0.0
        %v830 = vrot.slane %v829, 4
        %v831 = vadd.f32 %v829, %v830
        %v832 = vrot.slane %v831, 2
        %v833 = vadd.f32 %v831, %v832
        %v834 = vrot.slane %v833, 1
        %v835 = vadd.f32 %v833, %v834
        %v839 = vcombine.low %v821, %v828
        %v841 = vunpack.c.l.s4 1966171168
        %v842 = vunpack.c.0.s8 %v841
        %v843 = vlaneseq
        %v844 = vshrl.u32 %v843, 7
        %v845 = vsub.s32 %v842, %v844
        %v846 = vrot.slane %v839, %v845
        %v848 = vunpack.c.l.s4 1966171168
        %v849 = vunpack.c.0.s8 %v848
        %v850 = vlaneseq
        %v851 = vshrl.u32 %v850, 7
        %v852 = vsub.s32 %v849, %v851
        %v853 = vrot.slane %v835, %v852
        %v854 = vcombine.low %v846, %v853
        %v856 = vunpack.c.l.s4 1966171168
        %v857 = vunpack.c.0.s8 %v856
        %v858 = vlaneseq
        %v859 = vshrl.u32 %v858, 7
        %v860 = vsub.s32 %v857, %v859
        %v861 = vrot.slane %v854, %v860
        %s863 = scalar_lea.vmem %s225, 24
        %864 = vst.msk [vmem:[%s863] ss:$8 sm:$0x7] %vm287, %v861
        %865 = vst.msk [vmem:[%s863] ss:$8 sm:$0x0] %vm287, %v861
        %p866 = scmp.lt.s32.totalorder %s23, 1
        %s867 = scalar_select %p866, %s23, 1
        %p868 = scmp.lt.s32.totalorder %s24, 8
        %s869 = scalar_select %p868, %s24, 8
        %s870 = smul.addr %s869, 6
        %s871 = smul.addr %s867, 54
        %s872 = sadd.s32 %s870, %s871
        %s873 = smul.addr %s872, 8
        %s874 = scalar_lea.vmem %s2, %s873
        // Predicated region
        $region37: #{tpu_custom_call.1} parent=27 // pred_check
          %p875 = pneg %p105
        $region38: #{tpu_custom_call.1} parent=27 // pred_check_branch
          %877 = sbr.rel (%p875) target = $region40
        $region39: #{tpu_custom_call.1} parent=27 // pred_region
          _
        $region40: #{tpu_custom_call.1} parent=27 // pred_fallthru
          _
      $region28: #{tpu_custom_call.1} parent=5 // pred_fallthru
        _
      %p878 = scmp.le.s32.totalorder 2, %s14
      // Predicated region
      $region41: #{tpu_custom_call.1} parent=5 // pred_check
        %p879 = pneg %p878
      $region42: #{tpu_custom_call.1} parent=5 // pred_check_branch
        %881 = sbr.rel (%p879) target = $region44
      $region43: #{tpu_custom_call.1} parent=5 // pred_region
        %s882 = ssub.s32 %s14, 2
        // Predicated region
        $region45: #{tpu_custom_call.1} parent=43 // pred_check
          %p883 = pneg %p111
        $region46: #{tpu_custom_call.1} parent=43 // pred_check_branch
          %885 = sbr.rel (%p883) target = $region48
        $region47: #{tpu_custom_call.1} parent=43 // pred_region
          %p886 = scmp.lt.s32.totalorder %s25, 1
          %s887 = scalar_select %p886, %s25, 1
          %p888 = scmp.lt.s32.totalorder %s26, 8
          %s889 = scalar_select %p888, %s26, 8
          %s890 = smul.addr %s889, 6
          %s891 = smul.addr %s887, 54
          %s892 = sadd.s32 %s890, %s891
          %s893 = smul.addr %s892, 8
          %s894 = scalar_lea.vmem %s2, %s893
        $region48: #{tpu_custom_call.1} parent=43 // pred_fallthru
          _
      $region44: #{tpu_custom_call.1} parent=5 // pred_fallthru
        _
    $region6: #{tpu_custom_call.1} parent=1 // loop_footer
      %s18 = sadd.s32 1, %s14
    $region7: #{tpu_custom_call.1} parent=1 // loop_footer_branch
      %13 = sbr.rel target = $region3
    $region8: #{tpu_custom_call.1} parent=1 // loop_exit
      _
    %895 = vsyncpa [#allocation3], 1
    %s896 = scalar_lea.sflag [#allocation3], 1
    %897 = vsyncpa %s896, 1
    %898 = vsyncpa [#allocation5], 1
    %s899 = scalar_lea.sflag [#allocation5], 1
    %900 = vsyncpa %s899, 1

</llo_original>
